<compile_context>
chip_gen: v5e
topology: v5e:2x2
jax: 0.10.0
libtpu: 0.0.40
codegen_flags: <defaults>
</compile_context>

<pallas_src>
import functools

import jax
import jax.numpy as jnp
from jax.experimental import pallas as pl
from jax.experimental.pallas import tpu as pltpu


def _round_up(x, m):
    return ((x + m - 1) // m) * m


def _classifier_kernel(x_ref, w1_ref, b1_ref, w2_ref, b2_ref, o_ref, *,
                       rows_per_chunk):
    # x_ref : (tm, Dp)   f32 tile of token rows (cast to bf16 on the VPU here)
    # w1_ref: (Dp, Dp)   bf16 first linear weight (resident, single-buffered)
    # b1_ref: (1, Dp)    f32 first linear bias
    # w2_ref: (Dp, Np)   bf16 second linear weight (class dim padded to 128)
    # b2_ref: (1, Np)    f32 second linear bias (zero-padded)
    # o_ref : (tm, Np)   f32 lane-dense output logits tile
    n_chunks = x_ref.shape[0] // rows_per_chunk

    def chunk(c, carry):
        r0 = pl.multiple_of(c * rows_per_chunk, rows_per_chunk)
        x = x_ref[pl.ds(r0, rows_per_chunk), :].astype(jnp.bfloat16)
        h = jnp.dot(x, w1_ref[...], preferred_element_type=jnp.float32)  # MXU
        h = jnp.tanh(h + b1_ref[...]).astype(jnp.bfloat16)               # EUP
        s = jnp.dot(h, w2_ref[...], preferred_element_type=jnp.float32)
        o_ref[pl.ds(r0, rows_per_chunk), :] = (s + b2_ref[...]).astype(o_ref.dtype)
        return carry

    jax.lax.fori_loop(0, n_chunks, chunk, 0, unroll=True)


def classifier_forward(x, w1, b1, w2, b2):
    """x: [B, T, D] -> [B, T, n_cls] f32.  Computes tanh(x @ W1 + b1) @ W2 + b2."""
    B, T, D = x.shape
    n_cls = w2.shape[1]
    M = B * T

    # Row tile: minimize zero-row padding; >=2 grid steps when M > 128 so the
    # "parallel" axis shards across both TensorCores on v7x.
    if M <= 128:
        tm = max(8, _round_up(M, 8))
    else:
        cap = _round_up((M + 1) // 2, 128)
        cands = [t for t in (512, 384, 256, 128) if t <= cap] or [128]
        tm = min(cands, key=lambda t: (_round_up(M, t) - M, -t))
    M_pad = _round_up(M, tm)

    # Lane-dense hidden / class dims (zero padding -> numerically exact).
    Dp = _round_up(max(D, 128), 128)
    Np = _round_up(max(n_cls, 128), 128)

    # x stays f32 in HBM; bf16 cast happens inside the kernel.
    x2d = x.reshape(M, D).astype(jnp.float32)
    if (M_pad, Dp) != (M, D):
        x2d = jnp.pad(x2d, ((0, M_pad - M), (0, Dp - D)))

    w1p = w1.astype(jnp.float32)
    b1p = b1.astype(jnp.float32)
    if Dp != D:
        w1p = jnp.pad(w1p, ((0, Dp - D), (0, Dp - D)))
        b1p = jnp.pad(b1p, ((0, 0), (0, Dp - D)))
    w2p = w2.astype(jnp.float32)
    b2p = b2.astype(jnp.float32)
    if (Dp, Np) != (D, n_cls):
        w2p = jnp.pad(w2p, ((0, Dp - D), (0, Np - n_cls)))
        b2p = jnp.pad(b2p, ((0, 0), (0, Np - n_cls)))

    # Weights feed the MXU in bf16 (one-time cast; halves resident VMEM + DMA).
    w1_bf = w1p.astype(jnp.bfloat16)
    w2_bf = w2p.astype(jnp.bfloat16)

    rows_per_chunk = 128 if tm % 128 == 0 else tm
    grid = (M_pad // tm,)

    # Right-sized VMEM budget: double-buffered x/out tiles + single-buffered
    # weights + slack, clamped to 75% of the physical per-core capacity.
    need = (2 * tm * Dp * 4            # x tiles (f32, double-buffered)
            + 2 * tm * Np * 4          # out tiles (f32, double-buffered)
            + Dp * Dp * 2              # W1 (bf16, single-buffered)
            + Dp * Np * 2              # W2 (bf16, single-buffered)
            + 8 * Dp * 4 + 8 * Np * 4  # biases (padded tiles)
            + (1 << 20))               # internal scratch slack
    try:
        cap_bytes = int(pltpu.get_tpu_info().vmem_capacity_bytes)
    except Exception:  # pragma: no cover - fallback if query unavailable
        cap_bytes = 64 * 1024 * 1024
    vmem_limit = int(min(max(need * 5 // 4, 32 * 1024 * 1024), cap_bytes * 3 // 4))

    cost = pl.CostEstimate(
        flops=2 * M_pad * Dp * (Dp + Np),
        transcendentals=M_pad * Dp,
        bytes_accessed=(M_pad * Dp * 4          # x (f32)
                        + Dp * Dp * 2           # W1 (bf16)
                        + Dp * Np * 2           # W2 (bf16)
                        + (Dp + Np) * 4         # biases (f32)
                        + M_pad * Np * 4),      # output (f32)
    )

    kernel = functools.partial(_classifier_kernel, rows_per_chunk=rows_per_chunk)

    out2d = pl.pallas_call(
        kernel,
        out_shape=jax.ShapeDtypeStruct((M_pad, Np), jnp.float32),
        grid_spec=pltpu.PrefetchScalarGridSpec(
            num_scalar_prefetch=0,
            grid=grid,
            in_specs=[
                pl.BlockSpec((tm, Dp), lambda i: (i, 0)),               # x rows tile
                pl.BlockSpec((Dp, Dp), lambda i: (0, 0),
                             pipeline_mode=pl.Buffered(1)),             # W1 resident
                pl.BlockSpec((1, Dp), lambda i: (0, 0),
                             pipeline_mode=pl.Buffered(1)),             # b1
                pl.BlockSpec((Dp, Np), lambda i: (0, 0),
                             pipeline_mode=pl.Buffered(1)),             # W2 resident
                pl.BlockSpec((1, Np), lambda i: (0, 0),
                             pipeline_mode=pl.Buffered(1)),             # b2
            ],
            out_specs=pl.BlockSpec((tm, Np), lambda i: (i, 0)),
        ),
        compiler_params=pltpu.CompilerParams(
            dimension_semantics=("parallel",),   # shards M across TCs on v7x
            vmem_limit_bytes=vmem_limit,
        ),
        cost_estimate=cost,
    )(x2d, w1_bf, b1p, w2_bf, b2p)

    out2d = out2d[:M, :n_cls]
    # PyTorch nn.Linear with f32 params returns f32 logits.
    return out2d.reshape(B, T, n_cls)


def init_params(key, hidden_size, n_cls=3, dtype=jnp.float32):
    """Deterministic init matching nn.Linear(hidden, hidden) and
    nn.Linear(hidden, n_cls); weights stored pre-transposed for x @ W."""
    k1, k2, k3, k4 = jax.random.split(key, 4)
    bound1 = 1.0 / jnp.sqrt(hidden_size)
    w1 = jax.random.uniform(k1, (hidden_size, hidden_size), dtype, -bound1, bound1)
    b1 = jax.random.uniform(k2, (1, hidden_size), dtype, -bound1, bound1)
    w2 = jax.random.uniform(k3, (hidden_size, n_cls), dtype, -bound1, bound1)
    b2 = jax.random.uniform(k4, (1, n_cls), dtype, -bound1, bound1)
    return w1, b1, w2, b2


if __name__ == "__main__":
    B, T, D, n_cls = 2, 8, 32, 3
    key = jax.random.PRNGKey(0)
    kx, kp = jax.random.split(key)

    x = jax.random.normal(kx, (B, T, D), jnp.float32)
    w1, b1, w2, b2 = init_params(kp, D, n_cls)

    out = classifier_forward(x, w1, b1, w2, b2)
    out = jax.block_until_ready(out)

    # Pure f32 reference (true Linear -> Tanh -> Linear semantics).
    x2d = x.reshape(-1, D)
    ref = (jnp.tanh(x2d @ w1 + b1) @ w2 + b2).reshape(B, T, n_cls)

    assert out.shape == (B, T, n_cls), out.shape
    assert out.dtype == jnp.float32, out.dtype
    max_err = float(jnp.max(jnp.abs(out - ref)))
    assert jnp.allclose(out, ref, atol=3e-2, rtol=3e-2), max_err

    print("KERNEL_OK")
</pallas_src>

<mosaic_0001>
module attributes {stable_mosaic.version = 11 : i64} {
  func.func @_classifier_kernel(%arg0: i32, %arg1: memref<16x128xf32, #tpu.memory_space<vmem>>, %arg2: memref<128x128xbf16, #tpu.memory_space<vmem>>, %arg3: memref<1x128xf32, #tpu.memory_space<vmem>>, %arg4: memref<128x128xbf16, #tpu.memory_space<vmem>>, %arg5: memref<1x128xf32, #tpu.memory_space<vmem>>, %arg6: memref<16x128xf32, #tpu.memory_space<vmem>>) attributes {dimension_semantics = [#tpu.dimension_semantics<parallel>], iteration_bounds = array<i64: 1>, scalar_prefetch = 0 : i64, scratch_operands = 0 : i64, tpu.core_type = #tpu.core_type<tc>, window_params = [{transform_indices = @transform_0, window_bounds = array<i64: 16, 128>}, {pipeline_mode = #tpu.pipeline_mode<synchronous>, transform_indices = @transform_1, window_bounds = array<i64: 128, 128>}, {pipeline_mode = #tpu.pipeline_mode<synchronous>, transform_indices = @transform_2, window_bounds = array<i64: 1, 128>}, {pipeline_mode = #tpu.pipeline_mode<synchronous>, transform_indices = @transform_3, window_bounds = array<i64: 128, 128>}, {pipeline_mode = #tpu.pipeline_mode<synchronous>, transform_indices = @transform_4, window_bounds = array<i64: 1, 128>}, {transform_indices = @transform_5, window_bounds = array<i64: 16, 128>}]} {
    %c0_i32 = arith.constant 0 : i32
    %c16_i32 = arith.constant 16 : i32
    %0 = arith.muli %c0_i32, %c16_i32 : i32
    %1 = tpu.assume_multiple %0, 16 : i32
    %2 = arith.index_cast %1 : i32 to index
    %c0 = arith.constant 0 : index
    %3 = vector.load %arg1[%2, %c0] : memref<16x128xf32, #tpu.memory_space<vmem>>, vector<16x128xf32>
    %4 = arith.truncf %3 : vector<16x128xf32> to vector<16x128xbf16>
    %c0_0 = arith.constant 0 : index
    %c0_1 = arith.constant 0 : index
    %5 = vector.load %arg2[%c0_0, %c0_1] : memref<128x128xbf16, #tpu.memory_space<vmem>>, vector<128x128xbf16>
    %cst = arith.constant dense<0.000000e+00> : vector<16x128xf32>
    %6 = tpu.matmul %4, %5, %cst {dimension_numbers = #tpu.dot_dimension_numbers<[1], [0], [0], [1], [0, 0, 1, 1], [], []>} : vector<16x128xbf16>, vector<128x128xbf16>, vector<16x128xf32> -> vector<16x128xf32>
    %c0_2 = arith.constant 0 : index
    %c0_3 = arith.constant 0 : index
    %7 = vector.load %arg3[%c0_2, %c0_3] : memref<1x128xf32, #tpu.memory_space<vmem>>, vector<1x128xf32>
    %8 = vector.broadcast %7 : vector<1x128xf32> to vector<16x128xf32>
    %9 = arith.addf %6, %8 : vector<16x128xf32>
    %10 = math.tanh %9 : vector<16x128xf32>
    %11 = arith.truncf %10 : vector<16x128xf32> to vector<16x128xbf16>
    %c0_4 = arith.constant 0 : index
    %c0_5 = arith.constant 0 : index
    %12 = vector.load %arg4[%c0_4, %c0_5] : memref<128x128xbf16, #tpu.memory_space<vmem>>, vector<128x128xbf16>
    %cst_6 = arith.constant dense<0.000000e+00> : vector<16x128xf32>
    %13 = tpu.matmul %11, %12, %cst_6 {dimension_numbers = #tpu.dot_dimension_numbers<[1], [0], [0], [1], [0, 0, 1, 1], [], []>} : vector<16x128xbf16>, vector<128x128xbf16>, vector<16x128xf32> -> vector<16x128xf32>
    %c0_7 = arith.constant 0 : index
    %c0_8 = arith.constant 0 : index
    %14 = vector.load %arg5[%c0_7, %c0_8] : memref<1x128xf32, #tpu.memory_space<vmem>>, vector<1x128xf32>
    %15 = vector.broadcast %14 : vector<1x128xf32> to vector<16x128xf32>
    %16 = arith.addf %13, %15 : vector<16x128xf32>
    %17 = arith.index_cast %1 : i32 to index
    %c0_9 = arith.constant 0 : index
    %18 = vector.load %arg6[%17, %c0_9] : memref<16x128xf32, #tpu.memory_space<vmem>>, vector<16x128xf32>
    tpu.vector_store %arg6[%17, %c0_9], %16 {strides = array<i32>} : memref<16x128xf32, #tpu.memory_space<vmem>>, vector<16x128xf32>,
    %c1_i32 = arith.constant 1 : i32
    return
  }
  func.func @transform_0(%arg0: i32) -> (i32, i32) {
    %c0_i32 = arith.constant 0 : i32
    %c0_i32_0 = arith.constant 0 : i32
    return %arg0, %c0_i32 : i32, i32
  }
  func.func @transform_1(%arg0: i32) -> (i32, i32) {
    %c0_i32 = arith.constant 0 : i32
    %c0_i32_0 = arith.constant 0 : i32
    %c0_i32_1 = arith.constant 0 : i32
    return %c0_i32, %c0_i32_0 : i32, i32
  }
  func.func @transform_2(%arg0: i32) -> (i32, i32) {
    %c0_i32 = arith.constant 0 : i32
    %c0_i32_0 = arith.constant 0 : i32
    %c0_i32_1 = arith.constant 0 : i32
    return %c0_i32, %c0_i32_0 : i32, i32
  }
  func.func @transform_3(%arg0: i32) -> (i32, i32) {
    %c0_i32 = arith.constant 0 : i32
    %c0_i32_0 = arith.constant 0 : i32
    %c0_i32_1 = arith.constant 0 : i32
    return %c0_i32, %c0_i32_0 : i32, i32
  }
  func.func @transform_4(%arg0: i32) -> (i32, i32) {
    %c0_i32 = arith.constant 0 : i32
    %c0_i32_0 = arith.constant 0 : i32
    %c0_i32_1 = arith.constant 0 : i32
    return %c0_i32, %c0_i32_0 : i32, i32
  }
  func.func @transform_5(%arg0: i32) -> (i32, i32) {
    %c0_i32 = arith.constant 0 : i32
    %c0_i32_0 = arith.constant 0 : i32
    return %arg0, %c0_i32 : i32, i32
  }
}

</mosaic_0001>

<llo_original>
// kernel: tpu_custom_call.1
$region0: #{tpu_custom_call.1}
  #allocation0 [shape = 'u32[]', space=smem, size = 0x4, offset = 0x4, fixed_abs, tag = 'smem constant byte address 0x4 - core index']
  #allocation1 [shape = 'u32[72,128]{1,0:T(1,128)}', space=vmem, size = 0x9000, scoped, tag = 'internal scratch']
  %s0 = inlined_call_operand.hbm [shape: f32[16,128], index: 0, kind: input, shape index: {}]
  %s1 = inlined_call_operand.hbm [shape: bf16[128,128], index: 1, kind: input, shape index: {}]
  %s2 = inlined_call_operand.vmem [shape: f32[1,128], index: 2, kind: input, shape index: {}]
  %s3 = inlined_call_operand.hbm [shape: bf16[128,128], index: 3, kind: input, shape index: {}]
  %s4 = inlined_call_operand.vmem [shape: f32[1,128], index: 4, kind: input, shape index: {}]
  %s5 = inlined_call_operand.hbm [shape: f32[16,128], index: 5, kind: output, shape index: {}]
  %s6 = sld [smem:[#allocation0]]
  $region42: #{tpu_custom_call.1} parent=0
    _
  %s8 = ssub.s32 1, %s6
  %s9 = scalar_select 0, %s8, %s6
  $region1: #{tpu_custom_call.1} parent=0
    #allocation2 [shape = 'u8[8192]{0}', space=vmem, size = 0x2000, scoped, tag = 'input window, operand 0, single buffered']
    #allocation3 [shape = 's32[1]{0}', space=sflag, size = 0x4, scoped, tag = 'scoped memory for tpu_custom_call.1']
    #allocation4 [shape = 's32[1]{0}', space=sflag, size = 0x4, scoped, tag = 'scoped memory for tpu_custom_call.1']
    #allocation5 [shape = 'u8[32768]{0}', space=vmem, size = 0x8000, scoped, tag = 'input window, operand 1, single buffered']
    #allocation6 [shape = 's32[1]{0}', space=sflag, size = 0x4, scoped, tag = 'scoped memory for tpu_custom_call.1']
    #allocation7 [shape = 'u8[32768]{0}', space=vmem, size = 0x8000, scoped, tag = 'input window, operand 3, single buffered']
    #allocation8 [shape = 'u8[8192]{0}', space=vmem, size = 0x2000, scoped, tag = 'output window, operand 0, single buffered']
    %10 = vsyncpa [#allocation3], 0
    %11 = vsyncpa [#allocation6], 0
    %12 = vsyncpa [#allocation4], 0
    // Predicated region
    $region2: #{tpu_custom_call.1} parent=1 // pred_check
      _
    $region3: #{tpu_custom_call.1} parent=1 // pred_check_branch
      %14 = sbr.rel (0) target = $region5
    $region4: #{tpu_custom_call.1} parent=1 // pred_region
      %16 = vsyncadd [#allocation3], 0
      %s17 = sshll.u32 %s0, 4
      %s18 = int_to_ptr.hbm [resolvable:$true] %s17
      %s19 = sshll.u32 [#allocation2], 4
      %s20 = int_to_ptr.vmem [resolvable:$true] %s19
      %25 = dma.hbm_to_vmem [thread:$0]  %s18, 256, %s20, [#allocation3], 128, 128, 8
    $region5: #{tpu_custom_call.1} parent=1 // pred_fallthru
      _
    // Predicated region
    $region6: #{tpu_custom_call.1} parent=1 // pred_check
      _
    $region7: #{tpu_custom_call.1} parent=1 // pred_check_branch
      %27 = sbr.rel (0) target = $region9
    $region8: #{tpu_custom_call.1} parent=1 // pred_region
      %29 = vsyncadd [#allocation6], 0
      %s30 = sshll.u32 %s1, 4
      %s31 = int_to_ptr.hbm [resolvable:$true] %s30
      %s32 = sshll.u32 [#allocation5], 4
      %s33 = int_to_ptr.vmem [resolvable:$true] %s32
      %38 = dma.hbm_to_vmem [thread:$0]  %s31, 1024, %s33, [#allocation6], 64, 64, 4
    $region9: #{tpu_custom_call.1} parent=1 // pred_fallthru
      _
    // Predicated region
    $region10: #{tpu_custom_call.1} parent=1 // pred_check
      _
    $region11: #{tpu_custom_call.1} parent=1 // pred_check_branch
      %40 = sbr.rel (0) target = $region13
    $region12: #{tpu_custom_call.1} parent=1 // pred_region
      _
    $region13: #{tpu_custom_call.1} parent=1 // pred_fallthru
      _
    // Predicated region
    $region14: #{tpu_custom_call.1} parent=1 // pred_check
      _
    $region15: #{tpu_custom_call.1} parent=1 // pred_check_branch
      %42 = sbr.rel (0) target = $region17
    $region16: #{tpu_custom_call.1} parent=1 // pred_region
      %44 = vsyncadd [#allocation6], 0
      %s45 = sshll.u32 %s3, 4
      %s46 = int_to_ptr.hbm [resolvable:$true] %s45
      %s47 = sshll.u32 [#allocation7], 4
      %s48 = int_to_ptr.vmem [resolvable:$true] %s47
      %53 = dma.hbm_to_vmem [thread:$0]  %s46, 1024, %s48, [#allocation6], 64, 64, 4
    $region17: #{tpu_custom_call.1} parent=1 // pred_fallthru
      _
    // Predicated region
    $region18: #{tpu_custom_call.1} parent=1 // pred_check
      _
    $region19: #{tpu_custom_call.1} parent=1 // pred_check_branch
      %55 = sbr.rel (0) target = $region21
    $region20: #{tpu_custom_call.1} parent=1 // pred_region
      _
    $region21: #{tpu_custom_call.1} parent=1 // pred_fallthru
      _
    // Predicated region
    $region22: #{tpu_custom_call.1} parent=1 // pred_check
      _
    $region23: #{tpu_custom_call.1} parent=1 // pred_check_branch
      %57 = sbr.rel (0) target = $region25
    $region24: #{tpu_custom_call.1} parent=1 // pred_region
      %59 = dma.done [#allocation3], 256
    $region25: #{tpu_custom_call.1} parent=1 // pred_fallthru
      _
    // Predicated region
    $region26: #{tpu_custom_call.1} parent=1 // pred_check
      _
    $region27: #{tpu_custom_call.1} parent=1 // pred_check_branch
      %61 = sbr.rel (0) target = $region29
    $region28: #{tpu_custom_call.1} parent=1 // pred_region
      %63 = dma.done [#allocation6], 1024
    $region29: #{tpu_custom_call.1} parent=1 // pred_fallthru
      _
    // Predicated region
    $region30: #{tpu_custom_call.1} parent=1 // pred_check
      _
    $region31: #{tpu_custom_call.1} parent=1 // pred_check_branch
      %65 = sbr.rel (0) target = $region33
    $region32: #{tpu_custom_call.1} parent=1 // pred_region
      %67 = dma.done [#allocation6], 1024
    $region33: #{tpu_custom_call.1} parent=1 // pred_fallthru
      _
    %v68 = vld [vmem:[#allocation2] sm:$0xff]
    %v69 = vld [vmem:[#allocation2 + $0x8] sm:$0xff]
    %v70 = vpack.c.bf16 %v69, %v68
    %v71 = vld [vmem:[#allocation5] sm:$0xf]
    %v72 = vld [vmem:[#allocation5 + $0x4] sm:$0xf]
    %v73 = vld [vmem:[#allocation5 + $0x8] sm:$0xf]
    %v74 = vld [vmem:[#allocation5 + $0xc] sm:$0xf]
    %v75 = vld [vmem:[#allocation5 + $0x10] sm:$0xf]
    %v76 = vld [vmem:[#allocation5 + $0x14] sm:$0xf]
    %v77 = vld [vmem:[#allocation5 + $0x18] sm:$0xf]
    %v78 = vld [vmem:[#allocation5 + $0x1c] sm:$0xf]
    %v79 = vld [vmem:[#allocation5 + $0x20] sm:$0xf]
    %v80 = vld [vmem:[#allocation5 + $0x24] sm:$0xf]
    %v81 = vld [vmem:[#allocation5 + $0x28] sm:$0xf]
    %v82 = vld [vmem:[#allocation5 + $0x2c] sm:$0xf]
    %v83 = vld [vmem:[#allocation5 + $0x30] sm:$0xf]
    %v84 = vld [vmem:[#allocation5 + $0x34] sm:$0xf]
    %v85 = vld [vmem:[#allocation5 + $0x38] sm:$0xf]
    %v86 = vld [vmem:[#allocation5 + $0x3c] sm:$0xf]
    %v87 = vld [vmem:[%s2] sm:$0x1]
    %v89 = vperm.slane %v87, 0
    %v107 = vunpack.c.l.b16 %v71
    %v108 = vunpack.c.l.b16 %v72
    %v109 = vunpack.c.l.b16 %v73
    %v110 = vunpack.c.l.b16 %v74
    %v111 = vunpack.c.l.b16 %v75
    %v112 = vunpack.c.l.b16 %v76
    %v113 = vunpack.c.l.b16 %v77
    %v114 = vunpack.c.l.b16 %v78
    %v115 = vunpack.c.l.b16 %v79
    %v116 = vunpack.c.l.b16 %v80
    %v117 = vunpack.c.l.b16 %v81
    %v118 = vunpack.c.l.b16 %v82
    %v119 = vunpack.c.l.b16 %v83
    %v120 = vunpack.c.l.b16 %v84
    %v121 = vunpack.c.l.b16 %v85
    %v122 = vunpack.c.l.b16 %v86
    %v123 = vpack.c.b16 %v108, %v107
    %v124 = vpack.c.b16 %v110, %v109
    %v125 = vpack.c.b16 %v112, %v111
    %v126 = vpack.c.b16 %v114, %v113
    %v127 = vpack.c.b16 %v116, %v115
    %v128 = vpack.c.b16 %v118, %v117
    %v129 = vpack.c.b16 %v120, %v119
    %v130 = vpack.c.b16 %v122, %v121
    %139 = vmatpush.bf16.msra.mxu0 %v130
    %140 = vmatpush.bf16.msra.mxu0 %v129
    %141 = vmatpush.bf16.msra.mxu0 %v128
    %142 = vmatpush.bf16.msra.mxu0 %v127
    %143 = vmatpush.bf16.msra.mxu0 %v126
    %144 = vmatpush.bf16.msra.mxu0 %v125
    %145 = vmatpush.bf16.msra.mxu0 %v124
    %146 = vmatpush.bf16.msra.mxu0 %v123
    %147 = vmatmul.bf16.gmra.mxu0 %v70
    %v148 = vpop.f32.mrf.mxu0
    %v149 = vadd.f32 %v89, %v148
    %v150 = vpop.f32.mrf.mxu0
    %v151 = vadd.f32 %v89, %v150
    %152 = vdwg.mxu0
    %v153 = vtanh.pop %v149
    %v154 = vtanh.pop %v151
    %v155 = vpack.c.bf16 %v154, %v153
    %v156 = vld [vmem:[#allocation7] sm:$0xf]
    %v157 = vld [vmem:[#allocation7 + $0x4] sm:$0xf]
    %v158 = vld [vmem:[#allocation7 + $0x8] sm:$0xf]
    %v159 = vld [vmem:[#allocation7 + $0xc] sm:$0xf]
    %v160 = vld [vmem:[#allocation7 + $0x10] sm:$0xf]
    %v161 = vld [vmem:[#allocation7 + $0x14] sm:$0xf]
    %v162 = vld [vmem:[#allocation7 + $0x18] sm:$0xf]
    %v163 = vld [vmem:[#allocation7 + $0x1c] sm:$0xf]
    %v164 = vld [vmem:[#allocation7 + $0x20] sm:$0xf]
    %v165 = vld [vmem:[#allocation7 + $0x24] sm:$0xf]
    %v166 = vld [vmem:[#allocation7 + $0x28] sm:$0xf]
    %v167 = vld [vmem:[#allocation7 + $0x2c] sm:$0xf]
    %v168 = vld [vmem:[#allocation7 + $0x30] sm:$0xf]
    %v169 = vld [vmem:[#allocation7 + $0x34] sm:$0xf]
    %v170 = vld [vmem:[#allocation7 + $0x38] sm:$0xf]
    %v171 = vld [vmem:[#allocation7 + $0x3c] sm:$0xf]
    %v172 = vld [vmem:[%s4] sm:$0x1]
    %v174 = vperm.slane %v172, 0
    %v192 = vunpack.c.l.b16 %v156
    %v193 = vunpack.c.l.b16 %v157
    %v194 = vunpack.c.l.b16 %v158
    %v195 = vunpack.c.l.b16 %v159
    %v196 = vunpack.c.l.b16 %v160
    %v197 = vunpack.c.l.b16 %v161
    %v198 = vunpack.c.l.b16 %v162
    %v199 = vunpack.c.l.b16 %v163
    %v200 = vunpack.c.l.b16 %v164
    %v201 = vunpack.c.l.b16 %v165
    %v202 = vunpack.c.l.b16 %v166
    %v203 = vunpack.c.l.b16 %v167
    %v204 = vunpack.c.l.b16 %v168
    %v205 = vunpack.c.l.b16 %v169
    %v206 = vunpack.c.l.b16 %v170
    %v207 = vunpack.c.l.b16 %v171
    %v208 = vpack.c.b16 %v193, %v192
    %v209 = vpack.c.b16 %v195, %v194
    %v210 = vpack.c.b16 %v197, %v196
    %v211 = vpack.c.b16 %v199, %v198
    %v212 = vpack.c.b16 %v201, %v200
    %v213 = vpack.c.b16 %v203, %v202
    %v214 = vpack.c.b16 %v205, %v204
    %v215 = vpack.c.b16 %v207, %v206
    %224 = vmatpush.bf16.msra.mxu0 %v215
    %225 = vmatpush.bf16.msra.mxu0 %v214
    %226 = vmatpush.bf16.msra.mxu0 %v213
    %227 = vmatpush.bf16.msra.mxu0 %v212
    %228 = vmatpush.bf16.msra.mxu0 %v211
    %229 = vmatpush.bf16.msra.mxu0 %v210
    %230 = vmatpush.bf16.msra.mxu0 %v209
    %231 = vmatpush.bf16.msra.mxu0 %v208
    %232 = vmatmul.bf16.gmra.mxu0 %v155
    %v233 = vpop.f32.mrf.mxu0
    %v234 = vadd.f32 %v174, %v233
    %v235 = vpop.f32.mrf.mxu0
    %v236 = vadd.f32 %v174, %v235
    %237 = vdwg.mxu0
    %238 = vst [vmem:[#allocation8] sm:$0xff] %v234
    %239 = vst [vmem:[#allocation8 + $0x8] sm:$0xff] %v236
    // Predicated region
    $region34: #{tpu_custom_call.1} parent=1 // pred_check
      _
    $region35: #{tpu_custom_call.1} parent=1 // pred_check_branch
      %241 = sbr.rel (0) target = $region37
    $region36: #{tpu_custom_call.1} parent=1 // pred_region
      %243 = vsyncadd [#allocation4], 0
      %s244 = sshll.u32 [#allocation8], 4
      %s245 = int_to_ptr.vmem [resolvable:$true] %s244
      %s246 = sshll.u32 %s5, 4
      %s247 = int_to_ptr.hbm [resolvable:$true] %s246
      %252 = dma.vmem_to_hbm [thread:$0]  %s245, 256, %s247, [#allocation4], 128, 128, 8
    $region37: #{tpu_custom_call.1} parent=1 // pred_fallthru
      _
    // Predicated region
    $region38: #{tpu_custom_call.1} parent=1 // pred_check
      _
    $region39: #{tpu_custom_call.1} parent=1 // pred_check_branch
      %254 = sbr.rel (0) target = $region41
    $region40: #{tpu_custom_call.1} parent=1 // pred_region
      %256 = dma.done [#allocation4], 256
    $region41: #{tpu_custom_call.1} parent=1 // pred_fallthru
      _
    %257 = vsyncpa [#allocation3], 1
    %258 = vsyncpa [#allocation6], 1
    %259 = vsyncpa [#allocation4], 1

</llo_original>
